<compile_context>
chip_gen: v7x
topology: tpu7x:2x2x1
jax: 0.10.0
libtpu: 0.0.40
codegen_flags: <defaults>
</compile_context>

<pallas_src>
import functools

import jax
import jax.numpy as jnp
from jax.experimental import pallas as pl
from jax.experimental.pallas import tpu as pltpu

N_BINS = 15
_STATS_ROWS = 8          # sublane-padded stats rows: (count, conf_sum, acc_sum, 0...)


def _round_up(x, m):
    return ((x + m - 1) // m) * m


def _tpu_config():
    """Per-generation defaults: (num_chunks, vmem_working_budget, vmem_limit)."""
    try:
        kind = jax.devices()[0].device_kind.lower()
    except Exception:
        kind = ""
    mib = 1024 * 1024
    if "v7" in kind:                                  # 2 TCs/chip, 64 MiB VMEM/TC
        return 2, 24 * mib, 40 * mib
    if "v6" in kind or "v5" in kind or "v4" in kind:  # 1 TC, 128 MiB VMEM
        return 1, 48 * mib, 96 * mib
    return 1, 24 * mib, 40 * mib                      # unknown: conservative


def _pick_tile_n(n, c, itemsize, budget_bytes, tile_n=None):
    """Rows per block, sized from a VMEM byte budget (lane-padded footprint)."""
    c_pad = _round_up(c, 128)
    per_row = (2 * c_pad * itemsize    # double-buffered logits input block
               + 2 * 128 * 4           # double-buffered labels block ((tn,1) pads to 128 lanes)
               + 4 * c_pad * 4         # f32 temporaries: logits, expm, hit, col iota
               + 2 * 128 * 4           # onehot + stats-column tiles
               + 8 * 128 * 4)          # narrow [tn,1] temporaries (m, denom, conf, acc, ...)
    if tile_n is None:
        tile_n = budget_bytes // per_row
    # (8,128) rule: sublane dim of the block must be a multiple of 8 (16 is
    # also safe for packed bf16); never exceed the row count (except tiny n).
    max_tile = (n // 16) * 16 if n >= 16 else _round_up(max(n, 1), 8)
    tile_n = (int(tile_n) // 16) * 16
    tile_n = min(max(tile_n, 16), max_tile, 8192)
    return max(tile_n, 8)


def _ece_bin_stats_kernel(logits_ref, labels_ref, out_ref, *,
                          n_bins, n_rows, approx_recip):
    """Accumulate per-bin (count, conf_sum, acc_sum) into out_ref [8, nb_pad]."""
    t = pl.program_id(1)

    @pl.when(t == 0)
    def _():
        out_ref[...] = jnp.zeros_like(out_ref)

    logits = logits_ref[...].astype(jnp.float32)        # [TN, C]  (f32 math: v5e-safe)
    labels = labels_ref[...]                            # [TN, 1]  int32
    tn, c = logits.shape
    ones_c = jnp.ones((c, 1), jnp.float32)

    # softmax confidence: conf = 1 / sum(exp(x - max)).
    m = jnp.max(logits, axis=1, keepdims=True)          # [TN, 1]  (XLU, kept)
    expm = jnp.exp(logits - m)                          # [TN, C]  (EUP)
    # C-axis sum on the otherwise idle MXU instead of a second XLU reduction.
    denom = jnp.dot(expm, ones_c, preferred_element_type=jnp.float32)   # [TN, 1]
    conf = pl.reciprocal(denom, approx=approx_recip)    # [TN, 1]  (EUP)

    # accuracy: 1 iff the label's logit attains the row max.
    # TODO(synk): differs from torch argmax-index semantics only on exact
    # floating-point ties (argmax picks the lowest index; we count any tie as
    # correct) -- measure zero for real-valued logits.
    col = jax.lax.broadcasted_iota(jnp.int32, (tn, c), 1)
    hit = jnp.logical_and(col == labels, logits == m).astype(jnp.float32)
    acc = jnp.dot(hit, ones_c, preferred_element_type=jnp.float32)      # [TN, 1] in {0,1}

    # validity mask for padded rows / clamped duplicate tail tiles.
    tile_idx = pl.program_id(0) * pl.num_programs(1) + t
    row = tile_idx * tn + jax.lax.broadcasted_iota(jnp.int32, (tn, 1), 0)
    valid = row < n_rows                                # [TN, 1] bool
    valid_f = valid.astype(jnp.float32)
    # jnp.where selects (not multiplies) so NaN/Inf garbage in padded rows
    # cannot poison the MXU accumulation below.
    conf_v = jnp.where(valid, conf, 0.0)
    acc_v = jnp.where(valid, acc, 0.0)

    # bucketize: bin b holds conf in (b/n_bins, (b+1)/n_bins].
    bin_idx = jnp.ceil(conf_v * jnp.float32(n_bins)).astype(jnp.int32) - 1
    bin_idx = jnp.clip(bin_idx, 0, n_bins - 1)          # [TN, 1]

    nb_pad = out_ref.shape[-1]                          # lane-padded n_bins (128)
    krows = out_ref.shape[-2]                           # sublane-padded stats rows (8)
    bins = jax.lax.broadcasted_iota(jnp.int32, (tn, nb_pad), 1)
    onehot = jnp.logical_and(bins == bin_idx, valid).astype(jnp.float32)   # [TN, nb_pad]

    lane = jax.lax.broadcasted_iota(jnp.int32, (tn, krows), 1)
    stats_cols = jnp.where(lane == 0, valid_f,
                 jnp.where(lane == 1, conf_v,
                 jnp.where(lane == 2, acc_v, 0.0)))     # [TN, 8]

    # One MXU contraction over TN replaces 3 sublane reductions + 3 masked
    # sub-(8,128) read-modify-write stores:
    #   out[k, b] += sum_n stats_cols[n, k] * onehot[n, b]
    out_ref[...] += jax.lax.dot_general(
        stats_cols, onehot,
        dimension_numbers=(((0,), (0,)), ((), ())),
        preferred_element_type=jnp.float32)


def ece_loss(logits, labels, n_bins=N_BINS, tile_n=None, num_chunks=None,
             approx_recip=True):
    """logits: [N, C] (any float dtype), labels: [N] int -> ece: [1] float32."""
    n, c = logits.shape
    default_chunks, vmem_budget, vmem_limit = _tpu_config()
    if num_chunks is None:
        num_chunks = default_chunks
    tile_n = _pick_tile_n(n, c, jnp.dtype(logits.dtype).itemsize,
                          vmem_budget, tile_n)

    total_tiles = pl.cdiv(n, tile_n)
    p = max(1, min(num_chunks, total_tiles))
    tiles_per_chunk = pl.cdiv(total_tiles, p)
    nb_pad = _round_up(max(n_bins, 1), 128)

    labels2d = labels.reshape(n, 1).astype(jnp.int32)

    def row_map(pi, ti):
        # clamp so out-of-range tiles (fully masked inside the kernel)
        # never issue an out-of-bounds DMA.
        return (jnp.minimum(pi * tiles_per_chunk + ti, total_tiles - 1), 0)

    partials = pl.pallas_call(
        functools.partial(_ece_bin_stats_kernel, n_bins=n_bins, n_rows=n,
                          approx_recip=approx_recip),
        out_shape=jax.ShapeDtypeStruct((p, _STATS_ROWS, nb_pad), jnp.float32),
        grid=(p, tiles_per_chunk),
        in_specs=[
            pl.BlockSpec((tile_n, c), row_map),
            pl.BlockSpec((tile_n, 1), row_map),
        ],
        out_specs=pl.BlockSpec((None, _STATS_ROWS, nb_pad),
                               lambda pi, ti: (pi, 0, 0)),
        compiler_params=pltpu.CompilerParams(
            dimension_semantics=("parallel", "arbitrary"),
            vmem_limit_bytes=vmem_limit),
    )(logits, labels2d)            # native dtype on the wire (bf16 stays bf16)

    # Tiny epilogue over n_bins (=15) elements in plain JAX.
    stats = jnp.sum(partials, axis=0)                   # [8, nb_pad]
    cnt = stats[0, :n_bins]
    conf_sum = stats[1, :n_bins]
    acc_sum = stats[2, :n_bins]
    prop = cnt / jnp.float32(n)
    safe = jnp.maximum(cnt, jnp.float32(1.0))
    contrib = jnp.abs(conf_sum / safe - acc_sum / safe) * prop
    ece = jnp.sum(jnp.where(cnt > 0, contrib, 0.0))
    return ece.reshape(1).astype(jnp.float32)


def _ece_reference(logits, labels, n_bins=N_BINS):
    """Pure-JAX reference mirroring the PyTorch forward."""
    softmaxes = jax.nn.softmax(logits, axis=1)
    conf = jnp.max(softmaxes, axis=1)
    pred = jnp.argmax(softmaxes, axis=1)
    acc = (pred == labels).astype(jnp.float32)
    ece = jnp.zeros((1,), jnp.float32)
    bounds = jnp.linspace(0.0, 1.0, n_bins + 1)
    for b in range(n_bins):
        lo, hi = bounds[b], bounds[b + 1]
        in_bin = jnp.logical_and(conf > lo, conf <= hi)
        cnt = jnp.sum(in_bin.astype(jnp.float32))
        prop = cnt / conf.shape[0]
        safe = jnp.maximum(cnt, 1.0)
        avg_acc = jnp.sum(jnp.where(in_bin, acc, 0.0)) / safe
        avg_conf = jnp.sum(jnp.where(in_bin, conf, 0.0)) / safe
        ece = ece + jnp.where(cnt > 0, jnp.abs(avg_conf - avg_acc) * prop, 0.0)
    return ece


if __name__ == "__main__":
    key = jax.random.PRNGKey(0)
    k_logits, k_labels = jax.random.split(key)
    N, C = 200, 16
    logits = jax.random.normal(k_logits, (N, C), dtype=jnp.float32) * 3.0
    labels = jax.random.randint(k_labels, (N,), 0, C, dtype=jnp.int32)

    ref = _ece_reference(logits, labels)

    # Exact-reciprocal path with a tiny explicit tile and 2 chunks: exercises
    # tiling, the partial/clamped-tile masking and the chunk axis, and must
    # match the f32 reference tightly.
    ece_exact = ece_loss(logits, labels, tile_n=32, num_chunks=2,
                         approx_recip=False)
    jax.block_until_ready(ece_exact)
    assert ece_exact.shape == (1,)
    assert jnp.allclose(ece_exact, ref, atol=2e-5), (ece_exact, ref)

    # Default perf path: auto VMEM-budgeted tile, topology-aware chunks,
    # approx reciprocal (conf within ~1e-3 of a bin edge may land in the
    # adjacent bin, so the tolerance is looser here).
    ece_fast = ece_loss(logits, labels)
    jax.block_until_ready(ece_fast)
    assert ece_fast.shape == (1,)
    assert jnp.allclose(ece_fast, ref, atol=5e-2), (ece_fast, ref)

    # bf16-on-the-wire smoke test (kernel up-casts to f32 internally).
    ece_bf16 = ece_loss(logits.astype(jnp.bfloat16), labels)
    jax.block_until_ready(ece_bf16)
    assert bool(jnp.isfinite(ece_bf16).all()) and 0.0 <= float(ece_bf16[0]) <= 1.001

    print("KERNEL_OK")
</pallas_src>

<mosaic_0001>
module attributes {stable_mosaic.version = 11 : i64} {
  func.func @_ece_bin_stats_kernel(%arg0: i32, %arg1: i32, %arg2: memref<32x16xf32, #tpu.memory_space<vmem>>, %arg3: memref<32x1xi32, #tpu.memory_space<vmem>>, %arg4: memref<1x8x128xf32, #tpu.memory_space<vmem>>) attributes {dimension_semantics = [#tpu.dimension_semantics<parallel>, #tpu.dimension_semantics<arbitrary>], iteration_bounds = array<i64: 2, 4>, scalar_prefetch = 0 : i64, scratch_operands = 0 : i64, tpu.core_type = #tpu.core_type<tc>, window_params = [{transform_indices = @transform_0, window_bounds = array<i64: 32, 16>}, {transform_indices = @transform_1, window_bounds = array<i64: 32, 1>}, {transform_indices = @transform_2, window_bounds = array<i64: 1, 8, 128>}]} {
    %c0_i32 = arith.constant 0 : i32
    %0 = arith.cmpi eq, %arg1, %c0_i32 : i32
    %1 = arith.extui %0 : i1 to i32
    %c0_i32_0 = arith.constant 0 : i32
    %2 = arith.cmpi ne, %1, %c0_i32_0 : i32
    scf.if %2 {
      %cst_21 = arith.constant 0.000000e+00 : f32
      %77 = vector.broadcast %cst_21 : f32 to vector<8x128xf32>
      %c0_22 = arith.constant 0 : index
      %c0_23 = arith.constant 0 : index
      %c0_24 = arith.constant 0 : index
      %78 = vector.load %arg4[%c0_22, %c0_23, %c0_24] : memref<1x8x128xf32, #tpu.memory_space<vmem>>, vector<1x8x128xf32>
      %79 = vector.shape_cast %78 : vector<1x8x128xf32> to vector<8x128xf32>
      %80 = vector.shape_cast %77 : vector<8x128xf32> to vector<1x8x128xf32>
      tpu.vector_store %arg4[%c0_22, %c0_23, %c0_24], %80 {strides = array<i32>} : memref<1x8x128xf32, #tpu.memory_space<vmem>>, vector<1x8x128xf32>,
    } else {
    }
    %c0 = arith.constant 0 : index
    %c0_1 = arith.constant 0 : index
    %3 = vector.load %arg2[%c0, %c0_1] : memref<32x16xf32, #tpu.memory_space<vmem>>, vector<32x16xf32>
    %c0_2 = arith.constant 0 : index
    %c0_3 = arith.constant 0 : index
    %4 = vector.load %arg3[%c0_2, %c0_3] : memref<32x1xi32, #tpu.memory_space<vmem>>, vector<32x1xi32>
    %cst = arith.constant 1.000000e+00 : f32
    %5 = vector.broadcast %cst : f32 to vector<16x1xf32>
    %cst_4 = arith.constant dense<0xFF800000> : vector<32xf32>
    %6 = vector.multi_reduction <maximumf>, %3, %cst_4 [1] : vector<32x16xf32> to vector<32xf32>
    %7 = vector.shape_cast %6 : vector<32xf32> to vector<32x1xf32>
    %8 = vector.broadcast %7 : vector<32x1xf32> to vector<32x16xf32>
    %9 = arith.subf %3, %8 : vector<32x16xf32>
    %10 = math.exp %9 : vector<32x16xf32>
    %cst_5 = arith.constant dense<0.000000e+00> : vector<32x1xf32>
    %11 = tpu.matmul %10, %5, %cst_5 {dimension_numbers = #tpu.dot_dimension_numbers<[1], [0], [0], [1], [0, 0, 1, 1], [], []>} : vector<32x16xf32>, vector<16x1xf32>, vector<32x1xf32> -> vector<32x1xf32>
    %12 = tpu.reciprocal %11 : vector<32x1xf32> -> vector<32x1xf32>
    %13 = tpu.iota {dimensions = array<i32: 1>} : vector<32x16xi32>
    %14 = vector.broadcast %4 : vector<32x1xi32> to vector<32x16xi32>
    %15 = arith.cmpi eq, %13, %14 : vector<32x16xi32>
    %16 = vector.broadcast %7 : vector<32x1xf32> to vector<32x16xf32>
    %17 = arith.cmpf oeq, %3, %16 : vector<32x16xf32>
    %18 = arith.andi %15, %17 : vector<32x16xi1>
    %19 = arith.extui %18 : vector<32x16xi1> to vector<32x16xi32>
    %20 = arith.sitofp %19 : vector<32x16xi32> to vector<32x16xf32>
    %cst_6 = arith.constant dense<0.000000e+00> : vector<32x1xf32>
    %21 = tpu.matmul %20, %5, %cst_6 {dimension_numbers = #tpu.dot_dimension_numbers<[1], [0], [0], [1], [0, 0, 1, 1], [], []>} : vector<32x16xf32>, vector<16x1xf32>, vector<32x1xf32> -> vector<32x1xf32>
    %c4_i32 = arith.constant 4 : i32
    %22 = arith.muli %arg0, %c4_i32 : i32
    %23 = arith.addi %22, %arg1 : i32
    %c32_i32 = arith.constant 32 : i32
    %24 = arith.muli %23, %c32_i32 : i32
    %25 = tpu.iota {dimensions = array<i32: 0>} : vector<32x1xi32>
    %26 = vector.broadcast %24 : i32 to vector<32x1xi32>
    %27 = arith.addi %26, %25 : vector<32x1xi32>
    %c200_i32 = arith.constant 200 : i32
    %28 = vector.broadcast %c200_i32 : i32 to vector<32x1xi32>
    %29 = arith.cmpi slt, %27, %28 : vector<32x1xi32>
    %30 = arith.extui %29 : vector<32x1xi1> to vector<32x1xi32>
    %31 = arith.sitofp %30 : vector<32x1xi32> to vector<32x1xf32>
    %cst_7 = arith.constant 0.000000e+00 : f32
    %32 = vector.broadcast %cst_7 : f32 to vector<32x1xf32>
    %33 = arith.select %29, %12, %32 : vector<32x1xi1>, vector<32x1xf32>
    %cst_8 = arith.constant 0.000000e+00 : f32
    %34 = vector.broadcast %cst_8 : f32 to vector<32x1xf32>
    %35 = arith.select %29, %21, %34 : vector<32x1xi1>, vector<32x1xf32>
    %cst_9 = arith.constant 1.500000e+01 : f32
    %36 = vector.broadcast %cst_9 : f32 to vector<32x1xf32>
    %37 = arith.mulf %33, %36 : vector<32x1xf32>
    %38 = math.ceil %37 : vector<32x1xf32>
    %39 = arith.fptosi %38 : vector<32x1xf32> to vector<32x1xi32>
    %c1_i32 = arith.constant 1 : i32
    %40 = vector.broadcast %c1_i32 : i32 to vector<32x1xi32>
    %41 = arith.subi %39, %40 : vector<32x1xi32>
    %c0_i32_10 = arith.constant 0 : i32
    %c14_i32 = arith.constant 14 : i32
    %42 = vector.broadcast %c0_i32_10 : i32 to vector<32x1xi32>
    %43 = arith.maxsi %42, %41 : vector<32x1xi32>
    %44 = vector.broadcast %c14_i32 : i32 to vector<32x1xi32>
    %45 = arith.minsi %44, %43 : vector<32x1xi32>
    %46 = tpu.iota {dimensions = array<i32: 1>} : vector<32x128xi32>
    %47 = vector.broadcast %45 : vector<32x1xi32> to vector<32x128xi32>
    %48 = arith.cmpi eq, %46, %47 : vector<32x128xi32>
    %49 = vector.broadcast %29 : vector<32x1xi1> to vector<32x128xi1>
    %50 = arith.andi %48, %49 : vector<32x128xi1>
    %51 = arith.extui %50 : vector<32x128xi1> to vector<32x128xi32>
    %52 = arith.sitofp %51 : vector<32x128xi32> to vector<32x128xf32>
    %53 = tpu.iota {dimensions = array<i32: 1>} : vector<32x8xi32>
    %c0_i32_11 = arith.constant 0 : i32
    %54 = vector.broadcast %c0_i32_11 : i32 to vector<32x8xi32>
    %55 = arith.cmpi eq, %53, %54 : vector<32x8xi32>
    %c1_i32_12 = arith.constant 1 : i32
    %56 = vector.broadcast %c1_i32_12 : i32 to vector<32x8xi32>
    %57 = arith.cmpi eq, %53, %56 : vector<32x8xi32>
    %c2_i32 = arith.constant 2 : i32
    %58 = vector.broadcast %c2_i32 : i32 to vector<32x8xi32>
    %59 = arith.cmpi eq, %53, %58 : vector<32x8xi32>
    %cst_13 = arith.constant 0.000000e+00 : f32
    %60 = vector.shape_cast %35 : vector<32x1xf32> to vector<32x1xf32>
    %61 = vector.broadcast %60 : vector<32x1xf32> to vector<32x8xf32>
    %62 = vector.broadcast %cst_13 : f32 to vector<32x8xf32>
    %63 = arith.select %59, %61, %62 : vector<32x8xi1>, vector<32x8xf32>
    %64 = vector.shape_cast %33 : vector<32x1xf32> to vector<32x1xf32>
    %65 = vector.broadcast %64 : vector<32x1xf32> to vector<32x8xf32>
    %66 = arith.select %57, %65, %63 : vector<32x8xi1>, vector<32x8xf32>
    %67 = vector.shape_cast %31 : vector<32x1xf32> to vector<32x1xf32>
    %68 = vector.broadcast %67 : vector<32x1xf32> to vector<32x8xf32>
    %69 = arith.select %55, %68, %66 : vector<32x8xi1>, vector<32x8xf32>
    %c0_14 = arith.constant 0 : index
    %c0_15 = arith.constant 0 : index
    %c0_16 = arith.constant 0 : index
    %70 = vector.load %arg4[%c0_14, %c0_15, %c0_16] : memref<1x8x128xf32, #tpu.memory_space<vmem>>, vector<1x8x128xf32>
    %71 = vector.shape_cast %70 : vector<1x8x128xf32> to vector<8x128xf32>
    %cst_17 = arith.constant dense<0.000000e+00> : vector<8x128xf32>
    %72 = tpu.matmul %69, %52, %cst_17 {dimension_numbers = #tpu.dot_dimension_numbers<[0], [0], [1], [1], [0, 1, 1, 1], [], []>} : vector<32x8xf32>, vector<32x128xf32>, vector<8x128xf32> -> vector<8x128xf32>
    %73 = arith.addf %71, %72 : vector<8x128xf32>
    %c0_18 = arith.constant 0 : index
    %c0_19 = arith.constant 0 : index
    %c0_20 = arith.constant 0 : index
    %74 = vector.load %arg4[%c0_18, %c0_19, %c0_20] : memref<1x8x128xf32, #tpu.memory_space<vmem>>, vector<1x8x128xf32>
    %75 = vector.shape_cast %74 : vector<1x8x128xf32> to vector<8x128xf32>
    %76 = vector.shape_cast %73 : vector<8x128xf32> to vector<1x8x128xf32>
    tpu.vector_store %arg4[%c0_18, %c0_19, %c0_20], %76 {strides = array<i32>} : memref<1x8x128xf32, #tpu.memory_space<vmem>>, vector<1x8x128xf32>,
    return
  }
  func.func @transform_0(%arg0: i32, %arg1: i32) -> (i32, i32) {
    %c4_i32 = arith.constant 4 : i32
    %0 = arith.muli %arg0, %c4_i32 : i32
    %1 = arith.addi %0, %arg1 : i32
    %c6_i32 = arith.constant 6 : i32
    %2 = arith.minsi %1, %c6_i32 : i32
    %c0_i32 = arith.constant 0 : i32
    %c0_i32_0 = arith.constant 0 : i32
    return %2, %c0_i32 : i32, i32
  }
  func.func @transform_1(%arg0: i32, %arg1: i32) -> (i32, i32) {
    %c4_i32 = arith.constant 4 : i32
    %0 = arith.muli %arg0, %c4_i32 : i32
    %1 = arith.addi %0, %arg1 : i32
    %c6_i32 = arith.constant 6 : i32
    %2 = arith.minsi %1, %c6_i32 : i32
    %c0_i32 = arith.constant 0 : i32
    %c0_i32_0 = arith.constant 0 : i32
    return %2, %c0_i32 : i32, i32
  }
  func.func @transform_2(%arg0: i32, %arg1: i32) -> (i32, i32, i32) {
    %c0_i32 = arith.constant 0 : i32
    %c0_i32_0 = arith.constant 0 : i32
    %c0_i32_1 = arith.constant 0 : i32
    return %arg0, %c0_i32, %c0_i32_0 : i32, i32, i32
  }
}

</mosaic_0001>

<llo_original>
// kernel: tpu_custom_call.1
$region0: #{tpu_custom_call.1}
  #allocation0 [shape = 'u32[]', space=smem, size = 0x4, offset = 0x4, fixed_abs, tag = 'smem constant byte address 0x4 - core index']
  #allocation1 [shape = 'u32[144,128]{1,0:T(1,128)}', space=vmem, size = 0x12000, scoped, tag = 'internal scratch']
  %s0 = inlined_call_operand.vmem [shape: f32[200,16], index: 0, kind: input, shape index: {}]
  %s1 = inlined_call_operand.vmem [shape: s32[200,1], index: 1, kind: input, shape index: {}]
  %s2 = inlined_call_operand.hbm [shape: f32[2,8,128], index: 2, kind: output, shape index: {}]
  %s3 = sld [smem:[#allocation0]]
  $region45: #{tpu_custom_call.1} parent=0
    _
  %s5 = ssub.s32 1, %s3
  %s6 = scalar_select 0, %s5, %s3
  $region1: #{tpu_custom_call.1} parent=0
    #allocation2 [shape = 'u8[8192]{0}', space=vmem, size = 0x2000, scoped, tag = 'output window, operand 0']
    #allocation3 [shape = 's32[2]{0}', space=sflag, size = 0x8, scoped, tag = 'scoped memory for tpu_custom_call.1']
    %7 = vsyncpa [#allocation3], 0
    %s8 = scalar_lea.sflag [#allocation3], 1
    %9 = vsyncpa %s8, 0
    loop: start=0, step=1, limit=10
    $region2: #{tpu_custom_call.1} parent=1 // loop_pre_header
      _
    $region3: #{tpu_custom_call.1} parent=1 // loop_header
      %s11 = sphi 0, %s15
      %p12 = scmp.ge.s32.totalorder %s11, 10
      %s18 = sphi 0, %s30
      %s19 = sphi 0, %s26
      %s20 = sphi 0, %s18
      %s21 = sphi 0, %s19
      %s22 = sphi 0, %s20
      %s23 = sphi 0, %s21
      %s41 = sphi 0, %s43
      %s44 = sphi 0, %s41
      %s45 = sphi 0, %s44
      %s61 = sphi 0, %s45
      %s75 = sphi 0, %s77
      %s78 = sphi 0, %s75
      %s79 = sphi 0, %s78
      %s95 = sphi 0, %s79
      %s101 = sphi 0, %s103
      %s104 = sphi 0, %s101
      %s105 = sphi 0, %s104
      %s121 = sphi 0, %s105
    $region4: #{tpu_custom_call.1} parent=1 // loop_header_branch
      %14 = sbr.rel (%p12) target = $region8
    $region5: #{tpu_custom_call.1} parent=1 // loop_body
      %s16 = ssub.s32 %s11, 1
      %s17 = ssub.s32 %s11, 2
      %s24 = sadd.s32 1, %s19
      %p25 = scmp.ge.s32.totalorder %s24, 4
      %s26 = scalar_select %p25, 0, %s24
      %s27 = sadd.s32 1, %s18
      %s28 = scalar_select %p25, %s27, %s18
      %p29 = scmp.ge.s32.totalorder %s28, 2
      %s30 = scalar_select %p29, 0, %s28
      %s31 = smul.u32 %s18, 4
      %s32 = sadd.s32 %s31, %s19
      %p33 = scmp.lt.s32.totalorder %s32, 6
      %s34 = scalar_select %p33, %s32, 6
      %s35 = smul.u32 %s30, 4
      %s36 = sadd.s32 %s35, %s26
      %p37 = scmp.lt.s32.totalorder %s36, 6
      %s38 = scalar_select %p37, %s36, 6
      %s39 = ssub.s32 %s34, %s38
      %p40 = scmp.eq.s32.totalorder %s39, 0
      %s42 = sadd.s32 %s41, 1
      %s43 = scalar_select %p40, %s41, %s42
      %p46 = pneg %p40
      %p47 = scmp.eq.s32.totalorder %s11, 7
      %p48 = por %p46, %p47
      %p49 = scmp.ne.s32.totalorder %s41, %s44
      %p50 = scmp.eq.s32.totalorder %s11, 0
      %p51 = por %p49, %p50
      %p52 = scmp.ne.s32.totalorder %s41, %s44
      %p53 = scmp.eq.s32.totalorder %s16, 7
      %p54 = por %p52, %p53
      %p55 = scmp.ne.s32.totalorder %s44, %s45
      %p56 = scmp.eq.s32.totalorder %s16, 0
      %p57 = por %p55, %p56
      %p58 = scmp.ne.s32.totalorder %s44, %s45
      %p59 = scmp.eq.s32.totalorder %s17, 7
      %p60 = por %p58, %p59
      %p62 = scmp.ne.s32.totalorder %s45, %s61
      %p63 = scmp.eq.s32.totalorder %s17, 0
      %p64 = por %p62, %p63
      %s65 = smul.u32 %s18, 4
      %s66 = sadd.s32 %s65, %s19
      %p67 = scmp.lt.s32.totalorder %s66, 6
      %s68 = scalar_select %p67, %s66, 6
      %s69 = smul.u32 %s30, 4
      %s70 = sadd.s32 %s69, %s26
      %p71 = scmp.lt.s32.totalorder %s70, 6
      %s72 = scalar_select %p71, %s70, 6
      %s73 = ssub.s32 %s68, %s72
      %p74 = scmp.eq.s32.totalorder %s73, 0
      %s76 = sadd.s32 %s75, 1
      %s77 = scalar_select %p74, %s75, %s76
      %p80 = pneg %p74
      %p81 = scmp.eq.s32.totalorder %s11, 7
      %p82 = por %p80, %p81
      %p83 = scmp.ne.s32.totalorder %s75, %s78
      %p84 = scmp.eq.s32.totalorder %s11, 0
      %p85 = por %p83, %p84
      %p86 = scmp.ne.s32.totalorder %s75, %s78
      %p87 = scmp.eq.s32.totalorder %s16, 7
      %p88 = por %p86, %p87
      %p89 = scmp.ne.s32.totalorder %s78, %s79
      %p90 = scmp.eq.s32.totalorder %s16, 0
      %p91 = por %p89, %p90
      %p92 = scmp.ne.s32.totalorder %s78, %s79
      %p93 = scmp.eq.s32.totalorder %s17, 7
      %p94 = por %p92, %p93
      %p96 = scmp.ne.s32.totalorder %s79, %s95
      %p97 = scmp.eq.s32.totalorder %s17, 0
      %p98 = por %p96, %p97
      %s99 = ssub.s32 %s18, %s30
      %p100 = scmp.eq.s32.totalorder %s99, 0
      %s102 = sadd.s32 %s101, 1
      %s103 = scalar_select %p100, %s101, %s102
      %p106 = pneg %p100
      %p107 = scmp.eq.s32.totalorder %s11, 7
      %p108 = por %p106, %p107
      %p109 = scmp.ne.s32.totalorder %s101, %s104
      %p110 = scmp.eq.s32.totalorder %s11, 0
      %p111 = por %p109, %p110
      %p112 = scmp.ne.s32.totalorder %s101, %s104
      %p113 = scmp.eq.s32.totalorder %s16, 7
      %p114 = por %p112, %p113
      %p115 = scmp.ne.s32.totalorder %s104, %s105
      %p116 = scmp.eq.s32.totalorder %s16, 0
      %p117 = por %p115, %p116
      %p118 = scmp.ne.s32.totalorder %s104, %s105
      %p119 = scmp.eq.s32.totalorder %s17, 7
      %p120 = por %p118, %p119
      %p122 = scmp.ne.s32.totalorder %s105, %s121
      %p123 = scmp.eq.s32.totalorder %s17, 0
      %p124 = por %p122, %p123
      %p125 = scmp.le.s32.totalorder 1, %s11
      %p126 = scmp.lt.s32.totalorder %s11, 9
      %p127 = pnand %p125, %p126
      %p128 = pneg %p127
      // Predicated region
      $region9: #{tpu_custom_call.1} parent=5 // pred_check
        _
      $region10: #{tpu_custom_call.1} parent=5 // pred_check_branch
        %130 = sbr.rel (%p127) target = $region12
      $region11: #{tpu_custom_call.1} parent=5 // pred_region
        %s131 = ssub.s32 %s11, 1
      $region12: #{tpu_custom_call.1} parent=5 // pred_fallthru
        _
      %p132 = scmp.lt.s32.totalorder %s11, 8
      // Predicated region
      $region13: #{tpu_custom_call.1} parent=5 // pred_check
        %p133 = pneg %p132
      $region14: #{tpu_custom_call.1} parent=5 // pred_check_branch
        %135 = sbr.rel (%p133) target = $region16
      $region15: #{tpu_custom_call.1} parent=5 // pred_region
        // Predicated region
        $region17: #{tpu_custom_call.1} parent=15 // pred_check
          %p136 = pneg %p51
        $region18: #{tpu_custom_call.1} parent=15 // pred_check_branch
          %138 = sbr.rel (%p136) target = $region20
        $region19: #{tpu_custom_call.1} parent=15 // pred_region
          %s139 = smul.u32 %s18, 4
          %s140 = sadd.s32 %s139, %s19
          %p141 = scmp.lt.s32.totalorder %s140, 6
          %s142 = scalar_select %p141, %s140, 6
          %s143 = smul.u32 4, %s142
          %s144 = ssub.s32 25, %s143
          %p145 = scmp.lt.s32.totalorder %s144, 4
          %s146 = scalar_select %p145, %s144, 4
          %s147 = smul.u32 128, %s146
          %p148 = scmp.lt.s32.totalorder %s143, 24
          %s149 = scalar_select %p148, %s143, 24
          %s150 = smul.addr %s149, 8
          %s151 = scalar_lea.vmem %s0, %s150
          %s152 = smul.u32 %s18, 4
          %s153 = sadd.s32 %s152, %s19
          %p154 = scmp.lt.s32.totalorder %s153, 6
          %s155 = scalar_select %p154, %s153, 6
          %s156 = smul.u32 4, %s155
          %s157 = ssub.s32 25, %s156
          %p158 = scmp.lt.s32.totalorder %s157, 4
          %s159 = scalar_select %p158, %s157, 4
          %s160 = smul.u32 128, %s159
        $region20: #{tpu_custom_call.1} parent=15 // pred_fallthru
          _
        // Predicated region
        $region21: #{tpu_custom_call.1} parent=15 // pred_check
          %p161 = pneg %p85
        $region22: #{tpu_custom_call.1} parent=15 // pred_check_branch
          %163 = sbr.rel (%p161) target = $region24
        $region23: #{tpu_custom_call.1} parent=15 // pred_region
          %s164 = smul.u32 %s18, 4
          %s165 = sadd.s32 %s164, %s19
          %p166 = scmp.lt.s32.totalorder %s165, 6
          %s167 = scalar_select %p166, %s165, 6
          %s168 = smul.u32 4, %s167
          %s169 = ssub.s32 25, %s168
          %p170 = scmp.lt.s32.totalorder %s169, 4
          %s171 = scalar_select %p170, %s169, 4
          %s172 = smul.u32 128, %s171
          %p173 = scmp.lt.s32.totalorder %s168, 24
          %s174 = scalar_select %p173, %s168, 24
          %s175 = smul.addr %s174, 8
          %s176 = scalar_lea.vmem %s1, %s175
          %s177 = smul.u32 %s18, 4
          %s178 = sadd.s32 %s177, %s19
          %p179 = scmp.lt.s32.totalorder %s178, 6
          %s180 = scalar_select %p179, %s178, 6
          %s181 = smul.u32 4, %s180
          %s182 = ssub.s32 25, %s181
          %p183 = scmp.lt.s32.totalorder %s182, 4
          %s184 = scalar_select %p183, %s182, 4
          %s185 = smul.u32 128, %s184
        $region24: #{tpu_custom_call.1} parent=15 // pred_fallthru
          _
      $region16: #{tpu_custom_call.1} parent=5 // pred_fallthru
        _
      %p186 = scmp.le.s32.totalorder 1, %s11
      %p187 = scmp.lt.s32.totalorder %s11, 9
      %p188 = pnand %p186, %p187
      %p189 = pneg %p188
      // Predicated region
      $region25: #{tpu_custom_call.1} parent=5 // pred_check
        _
      $region26: #{tpu_custom_call.1} parent=5 // pred_check_branch
        %191 = sbr.rel (%p188) target = $region28
      $region27: #{tpu_custom_call.1} parent=5 // pred_region
        %s192 = ssub.s32 %s11, 1
        %s193 = smul.u32 %s20, 4
        %s194 = sadd.s32 %s193, %s21
        %p195 = scmp.lt.s32.totalorder %s194, 6
        %s196 = scalar_select %p195, %s194, 6
        %s197 = smul.u32 4, %s196
        %s198 = ssub.s32 25, %s197
        %p199 = scmp.lt.s32.totalorder %s198, 4
        %s200 = scalar_select %p199, %s198, 4
        %s201 = smul.u32 128, %s200
        %p202 = scmp.lt.s32.totalorder %s197, 24
        %s203 = scalar_select %p202, %s197, 24
        %s204 = smul.addr %s203, 8
        %s205 = scalar_lea.vmem %s0, %s204
        %p206 = pneg %p57
        %p207 = pneg %p54
        %s208 = smul.u32 %s20, 4
        %s209 = sadd.s32 %s208, %s21
        %p210 = scmp.lt.s32.totalorder %s209, 6
        %s211 = scalar_select %p210, %s209, 6
        %s212 = smul.u32 4, %s211
        %s213 = ssub.s32 25, %s212
        %p214 = scmp.lt.s32.totalorder %s213, 4
        %s215 = scalar_select %p214, %s213, 4
        %s216 = smul.u32 128, %s215
        %p217 = scmp.lt.s32.totalorder %s212, 24
        %s218 = scalar_select %p217, %s212, 24
        %s219 = smul.addr %s218, 8
        %s220 = scalar_lea.vmem %s1, %s219
        %p221 = pneg %p91
        %p222 = pneg %p88
        %p223 = pneg %p117
        %p224 = pneg %p114
        %s225 = sand.u32 %s104, 1
        %s226 = scalar_lea.sflag [#allocation3], %s225
        %s227 = sand.u32 %s104, 1
        %s228 = smul.addr %s227, 8
        %s229 = scalar_lea.vmem [#allocation2], %s228
        %s230 = smul.u32 %s20, 4
        %s231 = sadd.s32 %s230, %s21
        %p232 = scmp.lt.s32.totalorder %s231, 6
        %s233 = scalar_select %p232, %s231, 6
        %s234 = smul.u32 4, %s233
        %s235 = ssub.s32 25, %s234
        %p236 = scmp.lt.s32.totalorder %s235, 4
        %s237 = scalar_select %p236, %s235, 4
        %s238 = smul.u32 128, %s237
        %p239 = scmp.lt.s32.totalorder %s234, 24
        %s240 = scalar_select %p239, %s234, 24
        %s241 = smul.addr %s240, 8
        %s242 = scalar_lea.vmem %s0, %s241
        %s243 = smul.u32 %s20, 4
        %s244 = sadd.s32 %s243, %s21
        %p245 = scmp.lt.s32.totalorder %s244, 6
        %s246 = scalar_select %p245, %s244, 6
        %s247 = smul.u32 4, %s246
        %s248 = ssub.s32 25, %s247
        %p249 = scmp.lt.s32.totalorder %s248, 4
        %s250 = scalar_select %p249, %s248, 4
        %s251 = smul.u32 128, %s250
        %s252 = smul.u32 %s20, 4
        %s253 = sadd.s32 %s252, %s21
        %p254 = scmp.lt.s32.totalorder %s253, 6
        %s255 = scalar_select %p254, %s253, 6
        %s256 = smul.u32 4, %s255
        %s257 = ssub.s32 25, %s256
        %p258 = scmp.lt.s32.totalorder %s257, 4
        %s259 = scalar_select %p258, %s257, 4
        %s260 = smul.u32 128, %s259
        %p261 = scmp.lt.s32.totalorder %s256, 24
        %s262 = scalar_select %p261, %s256, 24
        %s263 = smul.addr %s262, 8
        %s264 = scalar_lea.vmem %s1, %s263
        %s265 = smul.u32 %s20, 4
        %s266 = sadd.s32 %s265, %s21
        %p267 = scmp.lt.s32.totalorder %s266, 6
        %s268 = scalar_select %p267, %s266, 6
        %s269 = smul.u32 4, %s268
        %s270 = ssub.s32 25, %s269
        %p271 = scmp.lt.s32.totalorder %s270, 4
        %s272 = scalar_select %p271, %s270, 4
        %s273 = smul.u32 128, %s272
        %p274 = scmp.eq.s32.totalorder %s21, 0
        // Predicated region
        $region29: #{tpu_custom_call.1} parent=27 // pred_check
          %p275 = pneg %p274
        $region30: #{tpu_custom_call.1} parent=27 // pred_check_branch
          %277 = sbr.rel (%p275) target = $region32
        $region31: #{tpu_custom_call.1} parent=27 // pred_region
          %278 = vst [vmem:[%s229] sm:$0xff] 0.0
        $region32: #{tpu_custom_call.1} parent=27 // pred_fallthru
          _
        %v279 = vld [vmem:[%s242] sm:$0xff]
        %v280 = vld [vmem:[%s242 + $0x8] sm:$0xff]
        %v281 = vld [vmem:[%s242 + $0x10] sm:$0xff]
        %v282 = vld [vmem:[%s242 + $0x18] sm:$0xff]
        %v283 = vld [vmem:[%s264] sm:$0xff]
        %v284 = vld [vmem:[%s264 + $0x8] sm:$0xff]
        %v285 = vld [vmem:[%s264 + $0x10] sm:$0xff]
        %v286 = vld [vmem:[%s264 + $0x18] sm:$0xff]
        %vm287 = vcmask 130048
        %v288 = vsel %vm287, %v279, -inf
        %289 = vmax.xlane.f32.xlu0 %v288
        %v290 = vpop.xlane.xlu0 %289
        %v291 = vsel %vm287, %v280, -inf
        %292 = vmax.xlane.f32.xlu0 %v291
        %v293 = vpop.xlane.xlu0 %292
        %v294 = vsel %vm287, %v281, -inf
        %295 = vmax.xlane.f32.xlu0 %v294
        %v296 = vpop.xlane.xlu0 %295
        %v297 = vsel %vm287, %v282, -inf
        %298 = vmax.xlane.f32.xlu0 %v297
        %v299 = vpop.xlane.xlu0 %298
        %v300 = vsub.f32 %v279, %v290
        %v301 = vsub.f32 %v280, %v293
        %v302 = vsub.f32 %v281, %v296
        %v303 = vsub.f32 %v282, %v299
        %v304 = vmul.f32 %v300, 1.442695
        %v305 = vpow.pop %v304
        %v306 = vmul.f32 %v301, 1.442695
        %v307 = vpow.pop %v306
        %v308 = vmul.f32 %v302, 1.442695
        %v309 = vpow.pop %v308
        %v310 = vmul.f32 %v303, 1.442695
        %v311 = vpow.pop %v310
        %v313 = vsel %vm287, %v305, 0
        %v316 = vsel %vm287, %v307, 0
        %v319 = vsel %vm287, %v309, 0
        %v322 = vsel %vm287, %v311, 0
        %324 = vmatprep.subr.mxu0 0.0
        %325 = vmatpush1.msra.mxu0 1.0
        %326 = vmatprep.subr.mxu0 0.0
        %327 = vmatpush1.msra.mxu0 1.0
        %328 = vmatprep.subr.mxu0 0.0
        %329 = vmatpush1.msra.mxu0 0.0
        %330 = vmatprep.subr.mxu0 0.0
        %331 = vmatpush1.msra.mxu0 0.0
        %332 = vmatprep.subr.mxu0 0.0
        %333 = vmatpush1.msra.mxu0 0.0
        %334 = vmatprep.subr.mxu0 0.0
        %335 = vmatpush1.msra.mxu0 0.0
        %336 = vmatprep.subr.mxu0 0.0
        %337 = vmatpush1.msra.mxu0 0.0
        %338 = vmatprep.subr.mxu0 0.0
        %339 = vmatpush1.msra.mxu0 0.0
        %340 = vmatprep.subr.mxu0 0.0
        %341 = vmatpush1.msra.mxu0 0.0
        %342 = vmatprep.subr.mxu0 0.0
        %343 = vmatpush1.msra.mxu0 0.0
        %344 = vmatprep.subr.mxu0 0.0
        %345 = vmatpush1.msra.mxu0 0.0
        %346 = vmatprep.subr.mxu0 0.0
        %347 = vmatpush1.msra.mxu0 0.0
        %348 = vmatprep.subr.mxu0 0.0
        %349 = vmatpush1.msra.mxu0 0.0
        %350 = vmatprep.subr.mxu0 0.0
        %351 = vmatpush1.msra.mxu0 0.0
        %352 = vmatprep.subr.mxu0 0.0
        %353 = vmatpush1.msra.mxu0 0.0
        %354 = vmatprep.subr.mxu0 0.0
        %355 = vmatpush1.msra.mxu0 0.0
        %356 = vmatprep.subr.mxu0 0.0
        %357 = vmatpush1.msra.mxu0 0.0
        %358 = vmatprep.subr.mxu0 0.0
        %359 = vmatpush1.msra.mxu0 0.0
        %360 = vmatprep.subr.mxu0 0.0
        %361 = vmatpush1.msra.mxu0 0.0
        %362 = vmatprep.subr.mxu0 0.0
        %363 = vmatpush1.msra.mxu0 0.0
        %364 = vmatprep.subr.mxu0 0.0
        %365 = vmatpush1.msra.mxu0 0.0
        %366 = vmatprep.subr.mxu0 0.0
        %367 = vmatpush1.msra.mxu0 0.0
        %368 = vmatprep.subr.mxu0 0.0
        %369 = vmatpush1.msra.mxu0 0.0
        %370 = vmatprep.subr.mxu0 0.0
        %371 = vmatpush1.msra.mxu0 0.0
        %372 = vmatprep.subr.mxu0 0.0
        %373 = vmatpush1.msra.mxu0 0.0
        %374 = vmatprep.subr.mxu0 0.0
        %375 = vmatpush1.msra.mxu0 0.0
        %376 = vmatprep.subr.mxu0 0.0
        %377 = vmatpush1.msra.mxu0 0.0
        %378 = vmatprep.subr.mxu0 0.0
        %379 = vmatpush1.msra.mxu0 0.0
        %380 = vmatprep.subr.mxu0 0.0
        %381 = vmatpush1.msra.mxu0 0.0
        %382 = vmatprep.subr.mxu0 0.0
        %383 = vmatpush1.msra.mxu0 0.0
        %384 = vmatprep.subr.mxu0 0.0
        %385 = vmatpush1.msra.mxu0 0.0
        %386 = vmatprep.subr.mxu0 0.0
        %387 = vmatpush1.msra.mxu0 0.0
        %388 = vmatprep.mubr.f32.mxu0 0.0
        %389 = vmatmul.mubr.f32.gmra.mrb[0].mxu0 %v313
        %v390 = vpop.f32.mrb[0].mxu0
        %v391 = vadd.f32 0.0, %v390
        %v392 = vpop.f32.mrb[0].mxu0
        %393 = vmatprep.mubr.f32.mxu0 0.0
        %394 = vmatmul.mubr.f32.gmra.mrb[0].mxu0 %v316
        %v395 = vpop.f32.mrb[0].mxu0
        %v396 = vadd.f32 0.0, %v395
        %v397 = vpop.f32.mrb[0].mxu0
        %398 = vmatprep.mubr.f32.mxu0 0.0
        %399 = vmatmul.mubr.f32.gmra.mrb[0].mxu0 %v319
        %v400 = vpop.f32.mrb[0].mxu0
        %v401 = vadd.f32 0.0, %v400
        %v402 = vpop.f32.mrb[0].mxu0
        %403 = vmatprep.mubr.f32.mxu0 0.0
        %404 = vmatmul.mubr.f32.gmra.mrb[0].mxu0 %v322
        %v405 = vpop.f32.mrb[0].mxu0
        %v406 = vadd.f32 0.0, %v405
        %v407 = vpop.f32.mrb[0].mxu0
        %408 = vdwg.mxu0
        %v409 = vrcp.pop %v391
        %v410 = vrcp.pop %v396
        %v411 = vrcp.pop %v401
        %v412 = vrcp.pop %v406
        %v413 = vlaneseq
        %v414 = vand.u32 %v413, 127
        %415 = vset.pattern.permute.xlu0 0
        %416 = vperm.xlu0 %415, %v283
        %v417 = vpop.permute.xlu0 %416
        %418 = vset.pattern.permute.xlu0 0
        %419 = vperm.xlu0 %418, %v284
        %v420 = vpop.permute.xlu0 %419
        %421 = vset.pattern.permute.xlu0 0
        %422 = vperm.xlu0 %421, %v285
        %v423 = vpop.permute.xlu0 %422
        %424 = vset.pattern.permute.xlu0 0
        %425 = vperm.xlu0 %424, %v286
        %v426 = vpop.permute.xlu0 %425
        %vm427 = vcmp.eq.s32.totalorder %v414, %v417
        %vm428 = vcmp.eq.s32.totalorder %v414, %v420
        %vm429 = vcmp.eq.s32.totalorder %v414, %v423
        %vm430 = vcmp.eq.s32.totalorder %v414, %v426
        %vm431 = vcmp.eq.f32.partialorder %v279, %v290
        %vm432 = vcmp.eq.f32.partialorder %v280, %v293
        %vm433 = vcmp.eq.f32.partialorder %v281, %v296
        %vm434 = vcmp.eq.f32.partialorder %v282, %v299
        %vm435 = vmand %vm427, %vm431
        %vm436 = vmand %vm428, %vm432
        %vm437 = vmand %vm429, %vm433
        %vm438 = vmand %vm430, %vm434
        %v439 = vsel %vm435, 1, 0
        %v440 = vsel %vm436, 1, 0
        %v441 = vsel %vm437, 1, 0
        %v442 = vsel %vm438, 1, 0
        %v443 = vcvt.s32.f32 %v439
        %v444 = vcvt.s32.f32 %v440
        %v445 = vcvt.s32.f32 %v441
        %v446 = vcvt.s32.f32 %v442
        %v448 = vsel %vm287, %v443, 0
        %v451 = vsel %vm287, %v444, 0
        %v454 = vsel %vm287, %v445, 0
        %v457 = vsel %vm287, %v446, 0
        %459 = vmatprep.subr.mxu0 0.0
        %460 = vmatpush1.msra.mxu0 1.0
        %461 = vmatprep.subr.mxu0 0.0
        %462 = vmatpush1.msra.mxu0 1.0
        %463 = vmatprep.subr.mxu0 0.0
        %464 = vmatpush1.msra.mxu0 0.0
        %465 = vmatprep.subr.mxu0 0.0
        %466 = vmatpush1.msra.mxu0 0.0
        %467 = vmatprep.subr.mxu0 0.0
        %468 = vmatpush1.msra.mxu0 0.0
        %469 = vmatprep.subr.mxu0 0.0
        %470 = vmatpush1.msra.mxu0 0.0
        %471 = vmatprep.subr.mxu0 0.0
        %472 = vmatpush1.msra.mxu0 0.0
        %473 = vmatprep.subr.mxu0 0.0
        %474 = vmatpush1.msra.mxu0 0.0
        %475 = vmatprep.subr.mxu0 0.0
        %476 = vmatpush1.msra.mxu0 0.0
        %477 = vmatprep.subr.mxu0 0.0
        %478 = vmatpush1.msra.mxu0 0.0
        %479 = vmatprep.subr.mxu0 0.0
        %480 = vmatpush1.msra.mxu0 0.0
        %481 = vmatprep.subr.mxu0 0.0
        %482 = vmatpush1.msra.mxu0 0.0
        %483 = vmatprep.subr.mxu0 0.0
        %484 = vmatpush1.msra.mxu0 0.0
        %485 = vmatprep.subr.mxu0 0.0
        %486 = vmatpush1.msra.mxu0 0.0
        %487 = vmatprep.subr.mxu0 0.0
        %488 = vmatpush1.msra.mxu0 0.0
        %489 = vmatprep.subr.mxu0 0.0
        %490 = vmatpush1.msra.mxu0 0.0
        %491 = vmatprep.subr.mxu0 0.0
        %492 = vmatpush1.msra.mxu0 0.0
        %493 = vmatprep.subr.mxu0 0.0
        %494 = vmatpush1.msra.mxu0 0.0
        %495 = vmatprep.subr.mxu0 0.0
        %496 = vmatpush1.msra.mxu0 0.0
        %497 = vmatprep.subr.mxu0 0.0
        %498 = vmatpush1.msra.mxu0 0.0
        %499 = vmatprep.subr.mxu0 0.0
        %500 = vmatpush1.msra.mxu0 0.0
        %501 = vmatprep.subr.mxu0 0.0
        %502 = vmatpush1.msra.mxu0 0.0
        %503 = vmatprep.subr.mxu0 0.0
        %504 = vmatpush1.msra.mxu0 0.0
        %505 = vmatprep.subr.mxu0 0.0
        %506 = vmatpush1.msra.mxu0 0.0
        %507 = vmatprep.subr.mxu0 0.0
        %508 = vmatpush1.msra.mxu0 0.0
        %509 = vmatprep.subr.mxu0 0.0
        %510 = vmatpush1.msra.mxu0 0.0
        %511 = vmatprep.subr.mxu0 0.0
        %512 = vmatpush1.msra.mxu0 0.0
        %513 = vmatprep.subr.mxu0 0.0
        %514 = vmatpush1.msra.mxu0 0.0
        %515 = vmatprep.subr.mxu0 0.0
        %516 = vmatpush1.msra.mxu0 0.0
        %517 = vmatprep.subr.mxu0 0.0
        %518 = vmatpush1.msra.mxu0 0.0
        %519 = vmatprep.subr.mxu0 0.0
        %520 = vmatpush1.msra.mxu0 0.0
        %521 = vmatprep.subr.mxu0 0.0
        %522 = vmatpush1.msra.mxu0 0.0
        %523 = vmatprep.mubr.f32.mxu0 0.0
        %524 = vmatmul.mubr.f32.gmra.mrb[0].mxu0 %v448
        %v525 = vpop.f32.mrb[0].mxu0
        %v526 = vadd.f32 0.0, %v525
        %v527 = vpop.f32.mrb[0].mxu0
        %528 = vmatprep.mubr.f32.mxu0 0.0
        %529 = vmatmul.mubr.f32.gmra.mrb[0].mxu0 %v451
        %v530 = vpop.f32.mrb[0].mxu0
        %v531 = vadd.f32 0.0, %v530
        %v532 = vpop.f32.mrb[0].mxu0
        %533 = vmatprep.mubr.f32.mxu0 0.0
        %534 = vmatmul.mubr.f32.gmra.mrb[0].mxu0 %v454
        %v535 = vpop.f32.mrb[0].mxu0
        %v536 = vadd.f32 0.0, %v535
        %v537 = vpop.f32.mrb[0].mxu0
        %538 = vmatprep.mubr.f32.mxu0 0.0
        %539 = vmatmul.mubr.f32.gmra.mrb[0].mxu0 %v457
        %v540 = vpop.f32.mrb[0].mxu0
        %v541 = vadd.f32 0.0, %v540
        %v542 = vpop.f32.mrb[0].mxu0
        %543 = vdwg.mxu0
        %s544 = smul.u32 %s20, 4
        %s545 = sadd.s32 %s544, %s21
        %s546 = smul.u32 %s545, 32
        %v547 = vlaneseq
        %v548 = vshrl.u32 %v547, 7
        %v549 = vadd.s32 %v548, 8
        %v550 = vadd.s32 %v548, 16
        %v551 = vadd.s32 %v548, 24
        %v552 = vstv %s546
        %v553 = vadd.s32 %v552, %v548
        %v554 = vadd.s32 %v552, %v549
        %v555 = vadd.s32 %v552, %v550
        %v556 = vadd.s32 %v552, %v551
        %vm557 = vcmp.lt.s32.totalorder %v553, 200
        %vm558 = vcmp.lt.s32.totalorder %v554, 200
        %vm559 = vcmp.lt.s32.totalorder %v555, 200
        %vm560 = vcmp.lt.s32.totalorder %v556, 200
        %v561 = vsel %vm557, 1, 0
        %v562 = vsel %vm558, 1, 0
        %v563 = vsel %vm559, 1, 0
        %v564 = vsel %vm560, 1, 0
        %v565 = vcvt.s32.f32 %v561
        %v566 = vcvt.s32.f32 %v562
        %v567 = vcvt.s32.f32 %v563
        %v568 = vcvt.s32.f32 %v564
        %v569 = vsel %vm557, %v409, 0.0
        %v570 = vsel %vm558, %v410, 0.0
        %v571 = vsel %vm559, %v411, 0.0
        %v572 = vsel %vm560, %v412, 0.0
        %v573 = vsel %vm557, %v526, 0.0
        %v574 = vsel %vm558, %v531, 0.0
        %v575 = vsel %vm559, %v536, 0.0
        %v576 = vsel %vm560, %v541, 0.0
        %v577 = vmul.f32 %v569, 15.0
        %v578 = vmul.f32 %v570, 15.0
        %v579 = vmul.f32 %v571, 15.0
        %v580 = vmul.f32 %v572, 15.0
        %v581 = vceil.f32 %v577
        %v582 = vceil.f32 %v578
        %v583 = vceil.f32 %v579
        %v584 = vceil.f32 %v580
        %v585 = vcvt.f32.s32.to.zero.pseudo %v581
        %v586 = vcvt.f32.s32.to.zero.pseudo %v582
        %v587 = vcvt.f32.s32.to.zero.pseudo %v583
        %v588 = vcvt.f32.s32.to.zero.pseudo %v584
        %v589 = vsub.s32 %v585, 1
        %v590 = vsub.s32 %v586, 1
        %v591 = vsub.s32 %v587, 1
        %v592 = vsub.s32 %v588, 1
        %vm593 = vcmp.gt.s32.totalorder %v589, 0
        %v594 = vsel %vm593, %v589, 0
        %vm595 = vcmp.gt.s32.totalorder %v590, 0
        %v596 = vsel %vm595, %v590, 0
        %vm597 = vcmp.gt.s32.totalorder %v591, 0
        %v598 = vsel %vm597, %v591, 0
        %vm599 = vcmp.gt.s32.totalorder %v592, 0
        %v600 = vsel %vm599, %v592, 0
        %vm601 = vcmp.lt.s32.totalorder %v594, 14
        %v602 = vsel %vm601, %v594, 14
        %vm603 = vcmp.lt.s32.totalorder %v596, 14
        %v604 = vsel %vm603, %v596, 14
        %vm605 = vcmp.lt.s32.totalorder %v598, 14
        %v606 = vsel %vm605, %v598, 14
        %vm607 = vcmp.lt.s32.totalorder %v600, 14
        %v608 = vsel %vm607, %v600, 14
        %609 = vset.pattern.permute.xlu0 0
        %610 = vperm.xlu0 %609, %v602
        %v611 = vpop.permute.xlu0 %610
        %612 = vset.pattern.permute.xlu0 0
        %613 = vperm.xlu0 %612, %v604
        %v614 = vpop.permute.xlu0 %613
        %615 = vset.pattern.permute.xlu0 0
        %616 = vperm.xlu0 %615, %v606
        %v617 = vpop.permute.xlu0 %616
        %618 = vset.pattern.permute.xlu0 0
        %619 = vperm.xlu0 %618, %v608
        %v620 = vpop.permute.xlu0 %619
        %vm621 = vcmp.eq.s32.totalorder %v414, %v611
        %vm622 = vcmp.eq.s32.totalorder %v414, %v614
        %vm623 = vcmp.eq.s32.totalorder %v414, %v617
        %vm624 = vcmp.eq.s32.totalorder %v414, %v620
        %vm625 = vcmp.eq.s32.totalorder %v561, 1
        %vm626 = vcmp.eq.s32.totalorder %v562, 1
        %vm627 = vcmp.eq.s32.totalorder %v563, 1
        %vm628 = vcmp.eq.s32.totalorder %v564, 1
        %vm629 = vmand %vm621, %vm625
        %vm630 = vmand %vm622, %vm626
        %vm631 = vmand %vm623, %vm627
        %vm632 = vmand %vm624, %vm628
        %v633 = vsel %vm629, 1, 0
        %v634 = vsel %vm630, 1, 0
        %v635 = vsel %vm631, 1, 0
        %v636 = vsel %vm632, 1, 0
        %v637 = vcvt.s32.f32 %v633
        %v638 = vcvt.s32.f32 %v634
        %v639 = vcvt.s32.f32 %v635
        %v640 = vcvt.s32.f32 %v636
        %vm641 = vcmp.eq.s32.totalorder %v414, 0
        %vm642 = vcmp.eq.s32.totalorder %v414, 1
        %vm643 = vcmp.eq.s32.totalorder %v414, 2
        %645 = vset.pattern.permute.xlu0 0
        %646 = vperm.xlu0 %645, %v573
        %v647 = vpop.permute.xlu0 %646
        %650 = vset.pattern.permute.xlu0 0
        %651 = vperm.xlu0 %650, %v574
        %v652 = vpop.permute.xlu0 %651
        %655 = vset.pattern.permute.xlu0 0
        %656 = vperm.xlu0 %655, %v575
        %v657 = vpop.permute.xlu0 %656
        %660 = vset.pattern.permute.xlu0 0
        %661 = vperm.xlu0 %660, %v576
        %v662 = vpop.permute.xlu0 %661
        %v664 = vsel %vm643, %v647, 0.0
        %v665 = vsel %vm643, %v652, 0.0
        %v666 = vsel %vm643, %v657, 0.0
        %v667 = vsel %vm643, %v662, 0.0
        %669 = vset.pattern.permute.xlu0 0
        %670 = vperm.xlu0 %669, %v569
        %v671 = vpop.permute.xlu0 %670
        %674 = vset.pattern.permute.xlu0 0
        %675 = vperm.xlu0 %674, %v570
        %v676 = vpop.permute.xlu0 %675
        %679 = vset.pattern.permute.xlu0 0
        %680 = vperm.xlu0 %679, %v571
        %v681 = vpop.permute.xlu0 %680
        %684 = vset.pattern.permute.xlu0 0
        %685 = vperm.xlu0 %684, %v572
        %v686 = vpop.permute.xlu0 %685
        %v688 = vsel %vm642, %v671, %v664
        %v689 = vsel %vm642, %v676, %v665
        %v690 = vsel %vm642, %v681, %v666
        %v691 = vsel %vm642, %v686, %v667
        %v692 = vsel %vm641, %v565, %v688
        %v693 = vsel %vm641, %v566, %v689
        %v694 = vsel %vm641, %v567, %v690
        %v695 = vsel %vm641, %v568, %v691
        %v696 = vld [vmem:[%s229] sm:$0xff]
        %697 = vxpose.xlu0.b32.start [1/16] %v692, 128
        %698 = vxpose.xlu0.b32.cont [2/16] %v693, 128
        %699 = vxpose.xlu0.b32.cont [3/16] %v694, 128
        %700 = vxpose.xlu0.b32.cont [4/16] %v695, 128
        %701 = vxpose.xlu0.b32.cont [5/16] 0.0, 128
        %702 = vxpose.xlu0.b32.cont [6/16] 0.0, 128
        %703 = vxpose.xlu0.b32.cont [7/16] 0.0, 128
        %704 = vxpose.xlu0.b32.cont [8/16] 0.0, 128
        %705 = vxpose.xlu0.b32.cont [9/16] 0.0, 128
        %706 = vxpose.xlu0.b32.cont [10/16] 0.0, 128
        %707 = vxpose.xlu0.b32.cont [11/16] 0.0, 128
        %708 = vxpose.xlu0.b32.cont [12/16] 0.0, 128
        %709 = vxpose.xlu0.b32.cont [13/16] 0.0, 128
        %710 = vxpose.xlu0.b32.cont [14/16] 0.0, 128
        %711 = vxpose.xlu0.b32.cont [15/16] 0.0, 128
        %712 = vxpose.xlu0.b32.end [16/16] 0.0, 128
        %v713 = vpop.trf.xlu0
        %v714 = vpop.trf.xlu0
        %v715 = vpop.trf.xlu0
        %v716 = vpop.trf.xlu0
        %v717 = vpop.trf.xlu0
        %v718 = vpop.trf.xlu0
        %v719 = vpop.trf.xlu0
        %v720 = vpop.trf.xlu0
        %v721 = vpop.trf.xlu0
        %v722 = vpop.trf.xlu0
        %v723 = vpop.trf.xlu0
        %v724 = vpop.trf.xlu0
        %v725 = vpop.trf.xlu0
        %v726 = vpop.trf.xlu0
        %v727 = vpop.trf.xlu0
        %v728 = vpop.trf.xlu0
        %vm729 = vcmask 261120
        %v731 = vsel %vm729, %v713, 0
        %733 = vmatprep.subr.mxu0 0.0
        %734 = vmatpush1.msra.mxu0 %v637
        %735 = vmatprep.subr.mxu0 0.0
        %736 = vmatpush1.msra.mxu0 %v638
        %737 = vmatprep.subr.mxu0 0.0
        %738 = vmatpush1.msra.mxu0 %v639
        %739 = vmatprep.subr.mxu0 0.0
        %740 = vmatpush1.msra.mxu0 %v640
        %741 = vmatprep.subr.mxu0 0.0
        %742 = vmatpush1.msra.mxu0 0.0
        %743 = vmatprep.subr.mxu0 0.0
        %744 = vmatpush1.msra.mxu0 0.0
        %745 = vmatprep.subr.mxu0 0.0
        %746 = vmatpush1.msra.mxu0 0.0
        %747 = vmatprep.subr.mxu0 0.0
        %748 = vmatpush1.msra.mxu0 0.0
        %749 = vmatprep.subr.mxu0 0.0
        %750 = vmatpush1.msra.mxu0 0.0
        %751 = vmatprep.subr.mxu0 0.0
        %752 = vmatpush1.msra.mxu0 0.0
        %753 = vmatprep.subr.mxu0 0.0
        %754 = vmatpush1.msra.mxu0 0.0
        %755 = vmatprep.subr.mxu0 0.0
        %756 = vmatpush1.msra.mxu0 0.0
        %757 = vmatprep.subr.mxu0 0.0
        %758 = vmatpush1.msra.mxu0 0.0
        %759 = vmatprep.subr.mxu0 0.0
        %760 = vmatpush1.msra.mxu0 0.0
        %761 = vmatprep.subr.mxu0 0.0
        %762 = vmatpush1.msra.mxu0 0.0
        %763 = vmatprep.subr.mxu0 0.0
        %764 = vmatpush1.msra.mxu0 0.0
        %765 = vmatprep.subr.mxu0 0.0
        %766 = vmatpush1.msra.mxu0 0.0
        %767 = vmatprep.subr.mxu0 0.0
        %768 = vmatpush1.msra.mxu0 0.0
        %769 = vmatprep.subr.mxu0 0.0
        %770 = vmatpush1.msra.mxu0 0.0
        %771 = vmatprep.subr.mxu0 0.0
        %772 = vmatpush1.msra.mxu0 0.0
        %773 = vmatprep.subr.mxu0 0.0
        %774 = vmatpush1.msra.mxu0 0.0
        %775 = vmatprep.subr.mxu0 0.0
        %776 = vmatpush1.msra.mxu0 0.0
        %777 = vmatprep.subr.mxu0 0.0
        %778 = vmatpush1.msra.mxu0 0.0
        %779 = vmatprep.subr.mxu0 0.0
        %780 = vmatpush1.msra.mxu0 0.0
        %781 = vmatprep.subr.mxu0 0.0
        %782 = vmatpush1.msra.mxu0 0.0
        %783 = vmatprep.subr.mxu0 0.0
        %784 = vmatpush1.msra.mxu0 0.0
        %785 = vmatprep.subr.mxu0 0.0
        %786 = vmatpush1.msra.mxu0 0.0
        %787 = vmatprep.subr.mxu0 0.0
        %788 = vmatpush1.msra.mxu0 0.0
        %789 = vmatprep.subr.mxu0 0.0
        %790 = vmatpush1.msra.mxu0 0.0
        %791 = vmatprep.subr.mxu0 0.0
        %792 = vmatpush1.msra.mxu0 0.0
        %793 = vmatprep.subr.mxu0 0.0
        %794 = vmatpush1.msra.mxu0 0.0
        %795 = vmatprep.subr.mxu0 0.0
        %796 = vmatpush1.msra.mxu0 0.0
        %797 = vmatprep.mubr.f32.mxu0 0.0
        %798 = vmatmul.mubr.f32.gmra.mrb[0].mxu0 %v731
        %v799 = vpop.f32.mrb[0].mxu0
        %v800 = vadd.f32 0.0, %v799
        %v801 = vpop.f32.mrb[0].mxu0
        %802 = vdwg.mxu0
        %v803 = vadd.f32 %v696, %v800
        %804 = vst [vmem:[%s229] sm:$0xff] %v803
        %s805 = sand.u32 %s104, 1
        %s806 = scalar_lea.sflag [#allocation3], %s805
        %s807 = sand.u32 %s104, 1
        %s808 = smul.addr %s807, 8
        %s809 = scalar_lea.vmem [#allocation2], %s808
        // Predicated region
        $region33: #{tpu_custom_call.1} parent=27 // pred_check
          %p810 = pneg %p114
        $region34: #{tpu_custom_call.1} parent=27 // pred_check_branch
          %812 = sbr.rel (%p810) target = $region36
        $region35: #{tpu_custom_call.1} parent=27 // pred_region
          %s814 = ssub.s32 128, 128
          %815 = vsyncadd %s806, %s814
          %s816 = smul.addr %s20, 128
          %s817 = scalar_lea.hbm %s2, %s816
          %s819 = sshll.u32 %s809, 4
          %s820 = int_to_ptr.vmem [resolvable:$true] %s819
          %822 = dma.vmem_to_hbm [thread:$0]  %s820, 128, %s817, %s806
        $region36: #{tpu_custom_call.1} parent=27 // pred_fallthru
          _
      $region28: #{tpu_custom_call.1} parent=5 // pred_fallthru
        _
      %p823 = scmp.le.s32.totalorder 2, %s11
      // Predicated region
      $region37: #{tpu_custom_call.1} parent=5 // pred_check
        %p824 = pneg %p823
      $region38: #{tpu_custom_call.1} parent=5 // pred_check_branch
        %826 = sbr.rel (%p824) target = $region40
      $region39: #{tpu_custom_call.1} parent=5 // pred_region
        %s827 = ssub.s32 %s11, 2
        // Predicated region
        $region41: #{tpu_custom_call.1} parent=39 // pred_check
          %p828 = pneg %p120
        $region42: #{tpu_custom_call.1} parent=39 // pred_check_branch
          %830 = sbr.rel (%p828) target = $region44
        $region43: #{tpu_custom_call.1} parent=39 // pred_region
          %s831 = sand.u32 %s105, 1
          %s832 = scalar_lea.sflag [#allocation3], %s831
          %s833 = sand.u32 %s105, 1
          %s834 = smul.addr %s833, 8
          %s835 = scalar_lea.vmem [#allocation2], %s834
          %836 = dma.done %s832, 128
        $region44: #{tpu_custom_call.1} parent=39 // pred_fallthru
          _
      $region40: #{tpu_custom_call.1} parent=5 // pred_fallthru
        _
    $region6: #{tpu_custom_call.1} parent=1 // loop_footer
      %s15 = sadd.s32 1, %s11
    $region7: #{tpu_custom_call.1} parent=1 // loop_footer_branch
      %10 = sbr.rel target = $region3
    $region8: #{tpu_custom_call.1} parent=1 // loop_exit
      _
    %837 = vsyncpa [#allocation3], 1
    %s838 = scalar_lea.sflag [#allocation3], 1
    %839 = vsyncpa %s838, 1

</llo_original>
